<compile_context>
chip_gen: v7x
topology: tpu7x:2x2x1
jax: 0.10.0
libtpu: 0.0.40
codegen_flags: <defaults>
</compile_context>

<pallas_src>
import functools

import jax
import jax.numpy as jnp
from jax import lax
from jax.experimental import pallas as pl
from jax.experimental.pallas import tpu as pltpu


# Contract the last dim of both operands: (tm, tk) x (tn, tk) -> (tm, tn).
_DIM_NUMS = (((1,), (1,)), ((), ()))


def _apply_activation(x, activation):
    if activation == "relu":
        return jnp.maximum(x, 0.0)
    if activation == "tanh":
        return jnp.tanh(x)
    return x  # Identity


def _mm_kernel_multi_k(b_ref, r_ref, o_ref, acc_ref, *, activation):
    """Grid = (B, gm, gn, gk); axis 3 (k) is the innermost reduction axis.

    b_ref : (tm, tk) tile of bulk        (batch dim squeezed out)
    r_ref : (tn, tk) tile of reference   (NOT transposed in HBM)
    o_ref : (tm, tn) output tile (resident across k)
    acc_ref: (tm, tn) f32 VMEM accumulator
    """
    @pl.when(pl.program_id(3) == 0)
    def _():
        acc_ref[...] = jnp.zeros_like(acc_ref)

    acc_ref[...] += lax.dot_general(
        b_ref[...], r_ref[...],
        dimension_numbers=_DIM_NUMS,
        preferred_element_type=jnp.float32,
    )

    @pl.when(pl.program_id(3) == pl.num_programs(3) - 1)
    def _():
        o_ref[...] = _apply_activation(acc_ref[...], activation).astype(o_ref.dtype)


def _mm_kernel_single_k(b_ref, r_ref, o_ref, *, activation):
    """Grid = (B, gm, gn); whole K fits in one tile — no accumulator needed."""
    acc = lax.dot_general(
        b_ref[...], r_ref[...],
        dimension_numbers=_DIM_NUMS,
        preferred_element_type=jnp.float32,
    )
    o_ref[...] = _apply_activation(acc, activation).astype(o_ref.dtype)


def _round_up(x, m):
    return ((x + m - 1) // m) * m


def _choose_tile(dim, align, cap):
    """Pick (tile, padded_dim): tile % align == 0, padded_dim % tile == 0.

    Small dims get a single full-size (aligned) tile; large dims pick the
    tile <= cap that minimizes zero-padding waste (ties -> larger tile).
    """
    d = _round_up(dim, align)
    if d <= cap:
        return d, d
    best_key, best = None, None
    for t in range(cap, 0, -align):
        p = _round_up(d, t)
        key = (p - d, -t)  # minimize padding first, then prefer larger tile
        if best_key is None or key < best_key:
            best_key, best = key, (t, p)
    return best


def _batched_matmul_t_act(bulk, reference, activation, out_dtype=None):
    """activation(bulk @ reference.transpose(-1,-2)) for (B,M,K) x (B,N,K)."""
    B, M, K = bulk.shape
    Br, N, Kr = reference.shape
    assert B == Br, f"batch mismatch: {B} vs {Br}"
    assert K == Kr, f"contraction dims mismatch: {K} vs {Kr}"

    out_dtype = jnp.dtype(out_dtype) if out_dtype is not None else bulk.dtype

    # Lane-aligned tiles: tm multiple of 8 (sublane), tn/tk multiples of 128
    # (lane).  512-class caps fill the 256-wide MXU on v6e/v7x and keep
    # double-buffered VMEM usage ~7 MiB, within every generation's budget.
    tm, Mp = _choose_tile(M, 8, 512)
    tn, Np = _choose_tile(N, 128, 512)
    tk, Kp = _choose_tile(K, 128, 512)

    if (Mp, Kp) != (M, K):
        bulk = jnp.pad(bulk, ((0, 0), (0, Mp - M), (0, Kp - K)))
    if (Np, Kp) != (N, K):
        reference = jnp.pad(reference, ((0, 0), (0, Np - N), (0, Kp - K)))

    gm, gn, gk = Mp // tm, Np // tn, Kp // tk

    in_itemsize = bulk.dtype.itemsize
    cost = pl.CostEstimate(
        flops=2 * B * Mp * Np * Kp,
        transcendentals=(B * Mp * Np) if activation == "tanh" else 0,
        bytes_accessed=(bulk.size + reference.size) * in_itemsize
        + B * Mp * Np * out_dtype.itemsize,
    )

    # Double-buffered inputs + double-buffered output + f32 accumulator.
    vmem_need = (
        2 * (tm * tk + tn * tk) * in_itemsize
        + 2 * tm * tn * out_dtype.itemsize
        + tm * tn * 4
    )
    # Clamp to the smallest physical VMEM (v7x: 64 MiB); never below the
    # common 32 MiB scoped default.
    vmem_limit = int(min(64 << 20, max(32 << 20, 2 * vmem_need)))

    if gk == 1:
        kernel = functools.partial(_mm_kernel_single_k, activation=activation)
        grid = (B, gm, gn)
        in_specs = [
            pl.BlockSpec((None, tm, tk), lambda b, i, j: (b, i, 0)),
            pl.BlockSpec((None, tn, tk), lambda b, i, j: (b, j, 0)),
        ]
        out_specs = pl.BlockSpec((None, tm, tn), lambda b, i, j: (b, i, j))
        scratch_shapes = []
        dim_sem = ("parallel", "parallel", "parallel")
    else:
        kernel = functools.partial(_mm_kernel_multi_k, activation=activation)
        grid = (B, gm, gn, gk)
        in_specs = [
            pl.BlockSpec((None, tm, tk), lambda b, i, j, k: (b, i, k)),
            pl.BlockSpec((None, tn, tk), lambda b, i, j, k: (b, j, k)),
        ]
        out_specs = pl.BlockSpec((None, tm, tn), lambda b, i, j, k: (b, i, j))
        scratch_shapes = [pltpu.VMEM((tm, tn), jnp.float32)]
        dim_sem = ("parallel", "parallel", "parallel", "arbitrary")

    out = pl.pallas_call(
        kernel,
        out_shape=jax.ShapeDtypeStruct((B, Mp, Np), out_dtype),
        grid_spec=pltpu.PrefetchScalarGridSpec(
            num_scalar_prefetch=0,
            grid=grid,
            in_specs=in_specs,
            out_specs=out_specs,
            scratch_shapes=scratch_shapes,
        ),
        compiler_params=pltpu.CompilerParams(
            dimension_semantics=dim_sem,
            vmem_limit_bytes=vmem_limit,
        ),
        cost_estimate=cost,
    )(bulk, reference)

    if (Mp, Np) != (M, N):
        out = out[:, :M, :N]
    return out


class Multiplier:
    """JAX/Pallas port of CnacerComposer.deconvolution._nn.Multiplier."""

    def __init__(self, activation=None, last_k: int = 1, use_bf16_inputs: bool = False):
        assert activation in ("relu", "tanh") or activation is None
        self.activation = activation
        self.last_k = last_k
        # Optional: feed the MXU bf16 operands (f32 accumulation kept, output
        # returned in the original dtype). Off by default to preserve numerics.
        self.use_bf16_inputs = use_bf16_inputs

    def _prep(self, x):
        x = jnp.asarray(x)
        out_dtype = x.dtype
        if self.use_bf16_inputs and x.dtype == jnp.float32:
            x = x.astype(jnp.bfloat16)
        return x, out_dtype

    def __call__(self, bulk, reference):
        if self.last_k == 1:
            b, out_dtype = self._prep(bulk)
            r, _ = self._prep(reference)
            return _batched_matmul_t_act(b[None], r[None], self.activation, out_dtype)[0]

        prepped = [self._prep(x) for x in bulk]
        bulks = [p[0] for p in prepped]
        out_dtype = prepped[0][1]
        refs = [self._prep(x)[0] for x in reference]

        homogeneous = (
            len(bulks) == len(refs)
            and all(x.shape == bulks[0].shape and x.dtype == bulks[0].dtype for x in bulks)
            and all(x.shape == refs[0].shape and x.dtype == refs[0].dtype for x in refs)
        )
        if homogeneous:
            # One pallas_call over a leading batch grid axis amortizes launch
            # and pipeline warm-up across the whole list.
            out = _batched_matmul_t_act(
                jnp.stack(bulks), jnp.stack(refs), self.activation, out_dtype
            )
            return [out[i] for i in range(out.shape[0])]

        # Heterogeneous shapes in the list: fall back to one call per pair.
        return [
            _batched_matmul_t_act(b[None], r[None], self.activation, b.dtype)[0]
            for b, r in zip(bulks, refs)
        ]


if __name__ == "__main__":
    key = jax.random.PRNGKey(0)
    k1, k2, k3, k4 = jax.random.split(key, 4)

    # Small shapes: bulk (M=8, K=32), reference (N=16, K=32) -> out (8, 16)
    bulk = jax.random.normal(k1, (8, 32), dtype=jnp.float32)
    reference = jax.random.normal(k2, (16, 32), dtype=jnp.float32)

    # last_k == 1, tanh activation
    mult_tanh = Multiplier(activation="tanh", last_k=1)
    out = mult_tanh(bulk, reference)
    out = jax.block_until_ready(out)
    ref_out = jnp.tanh(bulk @ reference.T)
    assert out.shape == (8, 16)
    assert out.dtype == jnp.float32
    assert jnp.allclose(out, ref_out, atol=1e-4, rtol=1e-4)

    # last_k == 2 (list semantics, batched into one pallas_call), relu activation
    bulk2 = jax.random.normal(k3, (8, 32), dtype=jnp.float32)
    reference2 = jax.random.normal(k4, (16, 32), dtype=jnp.float32)
    mult_relu = Multiplier(activation="relu", last_k=2)
    outs = mult_relu([bulk, bulk2], [reference, reference2])
    outs = jax.block_until_ready(outs)
    refs = [
        jnp.maximum(bulk @ reference.T, 0.0),
        jnp.maximum(bulk2 @ reference2.T, 0.0),
    ]
    for o, r in zip(outs, refs):
        assert o.shape == (8, 16)
        assert jnp.allclose(o, r, atol=1e-4, rtol=1e-4)

    # Identity activation, non-aligned K-reduction path (multi k-tile grid)
    big_b = jax.random.normal(k1, (200, 1100), dtype=jnp.float32)
    big_r = jax.random.normal(k2, (300, 1100), dtype=jnp.float32)
    mult_id = Multiplier(activation=None, last_k=1)
    big_out = jax.block_until_ready(mult_id(big_b, big_r))
    big_ref = big_b @ big_r.T
    assert big_out.shape == (200, 300)
    assert jnp.allclose(big_out, big_ref, atol=5e-3, rtol=5e-3)

    print("KERNEL_OK")
</pallas_src>

<mosaic_0001>
module attributes {stable_mosaic.version = 11 : i64} {
  func.func @_mm_kernel_single_k(%arg0: i32, %arg1: i32, %arg2: i32, %arg3: memref<1x8x128xf32, #tpu.memory_space<vmem>>, %arg4: memref<1x128x128xf32, #tpu.memory_space<vmem>>, %arg5: memref<1x8x128xf32, #tpu.memory_space<vmem>>) attributes {dimension_semantics = [#tpu.dimension_semantics<parallel>, #tpu.dimension_semantics<parallel>, #tpu.dimension_semantics<parallel>], iteration_bounds = array<i64: 1, 1, 1>, scalar_prefetch = 0 : i64, scratch_operands = 0 : i64, tpu.core_type = #tpu.core_type<tc>, window_params = [{transform_indices = @transform_0, window_bounds = array<i64: 1, 8, 128>}, {transform_indices = @transform_1, window_bounds = array<i64: 1, 128, 128>}, {transform_indices = @transform_2, window_bounds = array<i64: 1, 8, 128>}]} {
    %c0 = arith.constant 0 : index
    %c0_0 = arith.constant 0 : index
    %c0_1 = arith.constant 0 : index
    %0 = vector.load %arg3[%c0, %c0_0, %c0_1] : memref<1x8x128xf32, #tpu.memory_space<vmem>>, vector<1x8x128xf32>
    %1 = vector.shape_cast %0 : vector<1x8x128xf32> to vector<8x128xf32>
    %c0_2 = arith.constant 0 : index
    %c0_3 = arith.constant 0 : index
    %c0_4 = arith.constant 0 : index
    %2 = vector.load %arg4[%c0_2, %c0_3, %c0_4] : memref<1x128x128xf32, #tpu.memory_space<vmem>>, vector<1x128x128xf32>
    %3 = vector.shape_cast %2 : vector<1x128x128xf32> to vector<128x128xf32>
    %cst = arith.constant dense<0.000000e+00> : vector<8x128xf32>
    %4 = tpu.matmul %1, %3, %cst {dimension_numbers = #tpu.dot_dimension_numbers<[1], [1], [0], [0], [0, 0, 1, 0], [], []>} : vector<8x128xf32>, vector<128x128xf32>, vector<8x128xf32> -> vector<8x128xf32>
    %5 = math.tanh %4 : vector<8x128xf32>
    %c0_5 = arith.constant 0 : index
    %c0_6 = arith.constant 0 : index
    %c0_7 = arith.constant 0 : index
    %6 = vector.load %arg5[%c0_5, %c0_6, %c0_7] : memref<1x8x128xf32, #tpu.memory_space<vmem>>, vector<1x8x128xf32>
    %7 = vector.shape_cast %6 : vector<1x8x128xf32> to vector<8x128xf32>
    %8 = vector.shape_cast %5 : vector<8x128xf32> to vector<1x8x128xf32>
    tpu.vector_store %arg5[%c0_5, %c0_6, %c0_7], %8 {strides = array<i32>} : memref<1x8x128xf32, #tpu.memory_space<vmem>>, vector<1x8x128xf32>,
    return
  }
  func.func @transform_0(%arg0: i32, %arg1: i32, %arg2: i32) -> (i32, i32, i32) {
    %c0_i32 = arith.constant 0 : i32
    %c0_i32_0 = arith.constant 0 : i32
    return %arg0, %arg1, %c0_i32 : i32, i32, i32
  }
  func.func @transform_1(%arg0: i32, %arg1: i32, %arg2: i32) -> (i32, i32, i32) {
    %c0_i32 = arith.constant 0 : i32
    %c0_i32_0 = arith.constant 0 : i32
    return %arg0, %arg2, %c0_i32 : i32, i32, i32
  }
  func.func @transform_2(%arg0: i32, %arg1: i32, %arg2: i32) -> (i32, i32, i32) {
    %c0_i32 = arith.constant 0 : i32
    return %arg0, %arg1, %arg2 : i32, i32, i32
  }
}

</mosaic_0001>

<llo_original>
// kernel: tpu_custom_call.1
$region0: #{tpu_custom_call.1}
  #allocation0 [shape = 'u32[]', space=smem, size = 0x4, offset = 0x4, fixed_abs, tag = 'smem constant byte address 0x4 - core index']
  #allocation1 [shape = 'u32[144,128]{1,0:T(1,128)}', space=vmem, size = 0x12000, scoped, tag = 'internal scratch']
  %s0 = inlined_call_operand.hbm [shape: f32[1,8,128], index: 0, kind: input, shape index: {}]
  %s1 = inlined_call_operand.hbm [shape: f32[1,128,128], index: 1, kind: input, shape index: {}]
  %s2 = inlined_call_operand.hbm [shape: f32[1,8,128], index: 2, kind: output, shape index: {}]
  %s3 = sld [smem:[#allocation0]]
  $region26: #{tpu_custom_call.1} parent=0
    _
  %s5 = ssub.s32 1, %s3
  %s6 = scalar_select 0, %s5, %s3
  $region1: #{tpu_custom_call.1} parent=0
    #allocation2 [shape = 'u8[4096]{0}', space=vmem, size = 0x1000, scoped, tag = 'input window, operand 0, single buffered']
    #allocation3 [shape = 's32[1]{0}', space=sflag, size = 0x4, scoped, tag = 'scoped memory for tpu_custom_call.1']
    #allocation4 [shape = 's32[1]{0}', space=sflag, size = 0x4, scoped, tag = 'scoped memory for tpu_custom_call.1']
    #allocation5 [shape = 'u8[65536]{0}', space=vmem, size = 0x10000, scoped, tag = 'input window, operand 1, single buffered']
    #allocation6 [shape = 's32[1]{0}', space=sflag, size = 0x4, scoped, tag = 'scoped memory for tpu_custom_call.1']
    #allocation7 [shape = 'u8[4096]{0}', space=vmem, size = 0x1000, scoped, tag = 'output window, operand 0, single buffered']
    %7 = vsyncpa [#allocation3], 0
    %8 = vsyncpa [#allocation6], 0
    %9 = vsyncpa [#allocation4], 0
    // Predicated region
    $region2: #{tpu_custom_call.1} parent=1 // pred_check
      _
    $region3: #{tpu_custom_call.1} parent=1 // pred_check_branch
      %11 = sbr.rel (0) target = $region5
    $region4: #{tpu_custom_call.1} parent=1 // pred_region
      %s13 = ssub.s32 128, 128
      %14 = vsyncadd [#allocation3], %s13
      %s16 = sshll.u32 [#allocation2], 4
      %s17 = int_to_ptr.vmem [resolvable:$true] %s16
      %19 = dma.hbm_to_vmem [thread:$0]  %s0, 128, %s17, [#allocation3]
    $region5: #{tpu_custom_call.1} parent=1 // pred_fallthru
      _
    // Predicated region
    $region6: #{tpu_custom_call.1} parent=1 // pred_check
      _
    $region7: #{tpu_custom_call.1} parent=1 // pred_check_branch
      %21 = sbr.rel (0) target = $region9
    $region8: #{tpu_custom_call.1} parent=1 // pred_region
      %s23 = ssub.s32 2048, 2048
      %24 = vsyncadd [#allocation6], %s23
      %s25 = sshll.u32 [#allocation5], 4
      %s26 = int_to_ptr.vmem [resolvable:$true] %s25
      %31 = dma.hbm_to_vmem [thread:$0]  %s1, 2048, %s26, [#allocation6], 128, 128, 8
    $region9: #{tpu_custom_call.1} parent=1 // pred_fallthru
      _
    // Predicated region
    $region10: #{tpu_custom_call.1} parent=1 // pred_check
      _
    $region11: #{tpu_custom_call.1} parent=1 // pred_check_branch
      %33 = sbr.rel (0) target = $region13
    $region12: #{tpu_custom_call.1} parent=1 // pred_region
      %34 = dma.done [#allocation3], 128
    $region13: #{tpu_custom_call.1} parent=1 // pred_fallthru
      _
    // Predicated region
    $region14: #{tpu_custom_call.1} parent=1 // pred_check
      _
    $region15: #{tpu_custom_call.1} parent=1 // pred_check_branch
      %36 = sbr.rel (0) target = $region17
    $region16: #{tpu_custom_call.1} parent=1 // pred_region
      %37 = dma.done [#allocation6], 2048
    $region17: #{tpu_custom_call.1} parent=1 // pred_fallthru
      _
    %v38 = vld [vmem:[#allocation2] sm:$0xff]
    %v39 = vld [vmem:[#allocation5] sm:$0xff]
    %v40 = vld [vmem:[#allocation5 + $0x8] sm:$0xff]
    %v41 = vld [vmem:[#allocation5 + $0x10] sm:$0xff]
    %v42 = vld [vmem:[#allocation5 + $0x18] sm:$0xff]
    %v43 = vld [vmem:[#allocation5 + $0x20] sm:$0xff]
    %v44 = vld [vmem:[#allocation5 + $0x28] sm:$0xff]
    %v45 = vld [vmem:[#allocation5 + $0x30] sm:$0xff]
    %v46 = vld [vmem:[#allocation5 + $0x38] sm:$0xff]
    %v47 = vld [vmem:[#allocation5 + $0x40] sm:$0xff]
    %v48 = vld [vmem:[#allocation5 + $0x48] sm:$0xff]
    %v49 = vld [vmem:[#allocation5 + $0x50] sm:$0xff]
    %v50 = vld [vmem:[#allocation5 + $0x58] sm:$0xff]
    %v51 = vld [vmem:[#allocation5 + $0x60] sm:$0xff]
    %v52 = vld [vmem:[#allocation5 + $0x68] sm:$0xff]
    %v53 = vld [vmem:[#allocation5 + $0x70] sm:$0xff]
    %v54 = vld [vmem:[#allocation5 + $0x78] sm:$0xff]
    %55 = vmatprep.subr.mxu0 0.0
    %56 = vmatpush1.xpose.msra.mxu0 %v39
    %57 = vmatprep.subr.mxu0 0.0
    %58 = vmatpush1.xpose.msra.mxu0 %v40
    %59 = vmatprep.subr.mxu0 0.0
    %60 = vmatpush1.xpose.msra.mxu0 %v41
    %61 = vmatprep.subr.mxu0 0.0
    %62 = vmatpush1.xpose.msra.mxu0 %v42
    %63 = vmatprep.subr.mxu0 0.0
    %64 = vmatpush1.xpose.msra.mxu0 %v43
    %65 = vmatprep.subr.mxu0 0.0
    %66 = vmatpush1.xpose.msra.mxu0 %v44
    %67 = vmatprep.subr.mxu0 0.0
    %68 = vmatpush1.xpose.msra.mxu0 %v45
    %69 = vmatprep.subr.mxu0 0.0
    %70 = vmatpush1.xpose.msra.mxu0 %v46
    %71 = vmatprep.subr.mxu0 0.0
    %72 = vmatpush1.xpose.msra.mxu0 %v47
    %73 = vmatprep.subr.mxu0 0.0
    %74 = vmatpush1.xpose.msra.mxu0 %v48
    %75 = vmatprep.subr.mxu0 0.0
    %76 = vmatpush1.xpose.msra.mxu0 %v49
    %77 = vmatprep.subr.mxu0 0.0
    %78 = vmatpush1.xpose.msra.mxu0 %v50
    %79 = vmatprep.subr.mxu0 0.0
    %80 = vmatpush1.xpose.msra.mxu0 %v51
    %81 = vmatprep.subr.mxu0 0.0
    %82 = vmatpush1.xpose.msra.mxu0 %v52
    %83 = vmatprep.subr.mxu0 0.0
    %84 = vmatpush1.xpose.msra.mxu0 %v53
    %85 = vmatprep.subr.mxu0 0.0
    %86 = vmatpush1.xpose.msra.mxu0 %v54
    %87 = vmatprep.subr.mxu0 0.0
    %88 = vmatpush1.xpose.msra.mxu0 0.0
    %89 = vmatprep.subr.mxu0 0.0
    %90 = vmatpush1.xpose.msra.mxu0 0.0
    %91 = vmatprep.subr.mxu0 0.0
    %92 = vmatpush1.xpose.msra.mxu0 0.0
    %93 = vmatprep.subr.mxu0 0.0
    %94 = vmatpush1.xpose.msra.mxu0 0.0
    %95 = vmatprep.subr.mxu0 0.0
    %96 = vmatpush1.xpose.msra.mxu0 0.0
    %97 = vmatprep.subr.mxu0 0.0
    %98 = vmatpush1.xpose.msra.mxu0 0.0
    %99 = vmatprep.subr.mxu0 0.0
    %100 = vmatpush1.xpose.msra.mxu0 0.0
    %101 = vmatprep.subr.mxu0 0.0
    %102 = vmatpush1.xpose.msra.mxu0 0.0
    %103 = vmatprep.subr.mxu0 0.0
    %104 = vmatpush1.xpose.msra.mxu0 0.0
    %105 = vmatprep.subr.mxu0 0.0
    %106 = vmatpush1.xpose.msra.mxu0 0.0
    %107 = vmatprep.subr.mxu0 0.0
    %108 = vmatpush1.xpose.msra.mxu0 0.0
    %109 = vmatprep.subr.mxu0 0.0
    %110 = vmatpush1.xpose.msra.mxu0 0.0
    %111 = vmatprep.subr.mxu0 0.0
    %112 = vmatpush1.xpose.msra.mxu0 0.0
    %113 = vmatprep.subr.mxu0 0.0
    %114 = vmatpush1.xpose.msra.mxu0 0.0
    %115 = vmatprep.subr.mxu0 0.0
    %116 = vmatpush1.xpose.msra.mxu0 0.0
    %117 = vmatprep.subr.mxu0 0.0
    %118 = vmatpush1.xpose.msra.mxu0 0.0
    %119 = vmatprep.mubr.f32.mxu0 0.0
    %120 = vmatmul.mubr.f32.gmra.mrb[0].mxu0 %v38
    %v121 = vpop.f32.mrb[0].mxu0
    %v122 = vadd.f32 0.0, %v121
    %v123 = vpop.f32.mrb[0].mxu0
    %124 = vdwg.mxu0
    %v125 = vtanh.pop %v122
    %126 = vst [vmem:[#allocation7] sm:$0xff] %v125
    // Predicated region
    $region18: #{tpu_custom_call.1} parent=1 // pred_check
      _
    $region19: #{tpu_custom_call.1} parent=1 // pred_check_branch
      %128 = sbr.rel (0) target = $region21
    $region20: #{tpu_custom_call.1} parent=1 // pred_region
      %s130 = ssub.s32 128, 128
      %131 = vsyncadd [#allocation4], %s130
      %s133 = sshll.u32 [#allocation7], 4
      %s134 = int_to_ptr.vmem [resolvable:$true] %s133
      %136 = dma.vmem_to_hbm [thread:$0]  %s134, 128, %s2, [#allocation4]
    $region21: #{tpu_custom_call.1} parent=1 // pred_fallthru
      _
    // Predicated region
    $region22: #{tpu_custom_call.1} parent=1 // pred_check
      _
    $region23: #{tpu_custom_call.1} parent=1 // pred_check_branch
      %138 = sbr.rel (0) target = $region25
    $region24: #{tpu_custom_call.1} parent=1 // pred_region
      %139 = dma.done [#allocation4], 128
    $region25: #{tpu_custom_call.1} parent=1 // pred_fallthru
      _
    %140 = vsyncpa [#allocation3], 1
    %141 = vsyncpa [#allocation6], 1
    %142 = vsyncpa [#allocation4], 1

</llo_original>
